<compile_context>
chip_gen: v7x
topology: tpu7x:2x2x1
jax: 0.10.0
libtpu: 0.0.40
codegen_flags: <defaults>
</compile_context>

<pallas_src>
import jax
import jax.numpy as jnp
from jax.experimental import pallas as pl
from jax.experimental.pallas import tpu as pltpu


def _copy_kernel(x_ref, o_ref):
    # Pure tile copy: realizes the flattened view in a fresh output buffer.
    o_ref[...] = x_ref[...]


_LANE_CANDIDATES = (8192, 4096, 2048, 1024, 512, 256, 128)
_MAX_BLOCK_BYTES = 4 * 1024 * 1024   # per-buffer block; 2x in + 2x out <= 16 MiB live
_FULL_BLOCK_BYTES = 4 * 1024 * 1024  # threshold for the single full-array-block path


def _sublane_multiple(itemsize):
    # f32 -> 8, bf16 -> 16, int8/fp8 -> 32 (native sublane packing).
    return max(8, 32 // max(1, itemsize))


def _plan_dense_copy(total, itemsize):
    """Pick (lane, block_rows) for a dense, legal tiled copy of `total` elems.

    Returns None if `total` has no 128-multiple divisor (caller falls back).
    """
    sub = _sublane_multiple(itemsize)
    lane = next((c for c in _LANE_CANDIDATES if total % c == 0), None)
    if lane is None:
        return None
    rows = total // lane
    max_rows = max(1, _MAX_BLOCK_BYTES // (lane * itemsize))
    best = None
    d = 1
    while d * d <= rows:
        if rows % d == 0:
            for cand in (d, rows // d):
                # Legal block: sublane-multiple rows, or the full row extent.
                if cand <= max_rows and (cand % sub == 0 or cand == rows):
                    if best is None or cand > best:
                        best = cand
        d += 1
    if best is None:
        return None
    return (lane, best)


def _dense_copy(flat, total, itemsize, lane, block_rows):
    """Tiled lane-dense copy of a contiguous 1-D buffer of `total` elements."""
    rows = total // lane
    x2 = flat.reshape(rows, lane)                # metadata-only
    out2 = pl.pallas_call(
        _copy_kernel,
        out_shape=jax.ShapeDtypeStruct((rows, lane), flat.dtype),
        grid_spec=pltpu.PrefetchScalarGridSpec(
            num_scalar_prefetch=0,
            grid=(rows // block_rows,),
            in_specs=[pl.BlockSpec((block_rows, lane), lambda i: (i, 0))],
            out_specs=pl.BlockSpec((block_rows, lane), lambda i: (i, 0)),
        ),
        compiler_params=pltpu.CompilerParams(
            dimension_semantics=("parallel",),
            vmem_limit_bytes=32 * 1024 * 1024,
        ),
    )(x2)
    return out2.reshape(total)


def _full_block_copy(x2):
    """Single-block copy of a small (N, F) tensor (block == full array dims)."""
    return pl.pallas_call(
        _copy_kernel,
        out_shape=jax.ShapeDtypeStruct(x2.shape, x2.dtype),
        grid_spec=pltpu.PrefetchScalarGridSpec(
            num_scalar_prefetch=0,
            grid=(1,),
            in_specs=[pl.BlockSpec(x2.shape, lambda i: (0, 0))],
            out_specs=pl.BlockSpec(x2.shape, lambda i: (0, 0)),
        ),
        compiler_params=pltpu.CompilerParams(
            vmem_limit_bytes=32 * 1024 * 1024,
        ),
    )(x2)


def _materialized_flatten(x, n, f):
    """Copy kernel that materializes the flattened (N, F) tensor."""
    total = n * f
    itemsize = jnp.dtype(x.dtype).itemsize

    plan = _plan_dense_copy(total, itemsize)
    if plan is not None:
        lane, block_rows = plan
        flat = x.reshape(total)                  # metadata-only (contiguous)
        out_flat = _dense_copy(flat, total, itemsize, lane, block_rows)
        return out_flat.reshape(n, f)

    # No 128-multiple factorization.
    if total * itemsize <= _FULL_BLOCK_BYTES:
        # Small: single full-array block, no padding, no host-side extra copies.
        return _full_block_copy(x.reshape(n, f))

    # Large + odd element count: pad flat buffer to a dense factorization.
    sub = _sublane_multiple(itemsize)
    lane = 1024
    padded_total = total + ((-total) % (sub * lane))
    flat = jnp.pad(x.reshape(total), (0, padded_total - total))
    lane2, block_rows = _plan_dense_copy(padded_total, itemsize)
    out_flat = _dense_copy(flat, padded_total, itemsize, lane2, block_rows)
    return out_flat[:total].reshape(n, f)


def flatten_forward(x, unsqueeze: bool = False, materialize: bool = False):
    """Pallas equivalent of Flatten(unsqueeze).forward(x).

    x: (N, ...); returns (N, F) or (N, F, 1).
    materialize=False (default): pure metadata view, no kernel (fastest).
    materialize=True: tiled Pallas copy into a fresh output buffer.
    """
    n = x.shape[0]
    f = 1
    for d in x.shape[1:]:
        f *= d

    if materialize and n * f > 0:
        out = _materialized_flatten(x, n, f)
    else:
        # Metadata-only view, identical semantics to torch .view(N, -1).
        out = x.reshape(n, f)

    if unsqueeze:
        # Metadata-only trailing unsqueeze, same as torch .unsqueeze(-1).
        out = out[..., None]
    return out


if __name__ == "__main__":
    key = jax.random.PRNGKey(0)
    # Small NCHW input: batch=2, channels=4, spatial=16x16  -> F = 1024
    x = jax.random.normal(key, (2, 4, 16, 16), dtype=jnp.float32)
    y_ref = x.reshape(x.shape[0], -1)

    # Default (view-only) path, unsqueeze=False
    y = jax.block_until_ready(flatten_forward(x, unsqueeze=False))
    assert y.shape == (2, 4 * 16 * 16), y.shape
    assert jnp.array_equal(y, y_ref), "flatten view (unsqueeze=False) mismatch"

    # Default (view-only) path, unsqueeze=True
    yu = jax.block_until_ready(flatten_forward(x, unsqueeze=True))
    assert yu.shape == (2, 4 * 16 * 16, 1), yu.shape
    assert jnp.array_equal(yu, y_ref[..., None]), "flatten view (unsqueeze=True) mismatch"

    # Materializing Pallas copy path, unsqueeze=False
    ym = jax.block_until_ready(flatten_forward(x, unsqueeze=False, materialize=True))
    assert ym.shape == (2, 4 * 16 * 16), ym.shape
    assert jnp.array_equal(ym, y_ref), "flatten kernel (unsqueeze=False) mismatch"

    # Materializing Pallas copy path, unsqueeze=True
    y2 = jax.block_until_ready(flatten_forward(x, unsqueeze=True, materialize=True))
    assert y2.shape == (2, 4 * 16 * 16, 1), y2.shape
    assert jnp.array_equal(y2, y_ref[..., None]), "flatten kernel (unsqueeze=True) mismatch"

    # Non-128-multiple feature count exercises the full-block fallback.
    x_odd = jax.random.normal(key, (2, 3, 5, 7), dtype=jnp.float32)  # F = 105
    y_odd = jax.block_until_ready(flatten_forward(x_odd, materialize=True))
    assert jnp.array_equal(y_odd, x_odd.reshape(2, -1)), "flatten kernel (odd F) mismatch"

    print("KERNEL_OK")
</pallas_src>

<mosaic_0001>
module attributes {stable_mosaic.version = 11 : i64} {
  func.func @_copy_kernel(%arg0: i32, %arg1: memref<1x2048xf32, #tpu.memory_space<vmem>>, %arg2: memref<1x2048xf32, #tpu.memory_space<vmem>>) attributes {dimension_semantics = [#tpu.dimension_semantics<parallel>], iteration_bounds = array<i64: 1>, scalar_prefetch = 0 : i64, scratch_operands = 0 : i64, tpu.core_type = #tpu.core_type<tc>, window_params = [{transform_indices = @transform_0, window_bounds = array<i64: 1, 2048>}, {transform_indices = @transform_1, window_bounds = array<i64: 1, 2048>}]} {
    %c0 = arith.constant 0 : index
    %c0_0 = arith.constant 0 : index
    %0 = vector.load %arg1[%c0, %c0_0] : memref<1x2048xf32, #tpu.memory_space<vmem>>, vector<1x2048xf32>
    %c0_1 = arith.constant 0 : index
    %c0_2 = arith.constant 0 : index
    %1 = vector.load %arg2[%c0_1, %c0_2] : memref<1x2048xf32, #tpu.memory_space<vmem>>, vector<1x2048xf32>
    tpu.vector_store %arg2[%c0_1, %c0_2], %0 {strides = array<i32>} : memref<1x2048xf32, #tpu.memory_space<vmem>>, vector<1x2048xf32>,
    return
  }
  func.func @transform_0(%arg0: i32) -> (i32, i32) {
    %c0_i32 = arith.constant 0 : i32
    %c0_i32_0 = arith.constant 0 : i32
    return %arg0, %c0_i32 : i32, i32
  }
  func.func @transform_1(%arg0: i32) -> (i32, i32) {
    %c0_i32 = arith.constant 0 : i32
    %c0_i32_0 = arith.constant 0 : i32
    return %arg0, %c0_i32 : i32, i32
  }
}

</mosaic_0001>

<llo_original>
// kernel: tpu_custom_call.1
$region0: #{tpu_custom_call.1}
  #allocation0 [shape = 'u32[]', space=smem, size = 0x4, offset = 0x4, fixed_abs, tag = 'smem constant byte address 0x4 - core index']
  #allocation1 [shape = 'u32[144,128]{1,0:T(1,128)}', space=vmem, size = 0x12000, scoped, tag = 'internal scratch']
  %s0 = inlined_call_operand.hbm [shape: f32[1,2048], index: 0, kind: input, shape index: {}]
  %s1 = inlined_call_operand.hbm [shape: f32[1,2048], index: 1, kind: output, shape index: {}]
  %s2 = sld [smem:[#allocation0]]
  $region18: #{tpu_custom_call.1} parent=0
    _
  %s4 = ssub.s32 1, %s2
  %s5 = scalar_select 0, %s4, %s2
  $region1: #{tpu_custom_call.1} parent=0
    #allocation2 [shape = 'u8[8192]{0}', space=vmem, size = 0x2000, scoped, tag = 'input window, operand 0, single buffered']
    #allocation3 [shape = 's32[1]{0}', space=sflag, size = 0x4, scoped, tag = 'scoped memory for tpu_custom_call.1']
    #allocation4 [shape = 's32[1]{0}', space=sflag, size = 0x4, scoped, tag = 'scoped memory for tpu_custom_call.1']
    #allocation5 [shape = 'u8[8192]{0}', space=vmem, size = 0x2000, scoped, tag = 'output window, operand 0, single buffered']
    %6 = vsyncpa [#allocation3], 0
    %7 = vsyncpa [#allocation4], 0
    // Predicated region
    $region2: #{tpu_custom_call.1} parent=1 // pred_check
      _
    $region3: #{tpu_custom_call.1} parent=1 // pred_check_branch
      %9 = sbr.rel (0) target = $region5
    $region4: #{tpu_custom_call.1} parent=1 // pred_region
      %s11 = ssub.s32 256, 256
      %12 = vsyncadd [#allocation3], %s11
      %s14 = sshll.u32 [#allocation2], 4
      %s15 = int_to_ptr.vmem [resolvable:$true] %s14
      %17 = dma.hbm_to_vmem [thread:$0]  %s0, 256, %s15, [#allocation3]
    $region5: #{tpu_custom_call.1} parent=1 // pred_fallthru
      _
    // Predicated region
    $region6: #{tpu_custom_call.1} parent=1 // pred_check
      _
    $region7: #{tpu_custom_call.1} parent=1 // pred_check_branch
      %19 = sbr.rel (0) target = $region9
    $region8: #{tpu_custom_call.1} parent=1 // pred_region
      %20 = dma.done [#allocation3], 256
    $region9: #{tpu_custom_call.1} parent=1 // pred_fallthru
      _
    %v21 = vld [vmem:[#allocation2] sm:$0xff]
    %v22 = vld [vmem:[#allocation2 + $0x8] sm:$0xff]
    %23 = vst [vmem:[#allocation5] sm:$0xff] %v21
    %24 = vst [vmem:[#allocation5 + $0x8] sm:$0xff] %v22
    // Predicated region
    $region10: #{tpu_custom_call.1} parent=1 // pred_check
      _
    $region11: #{tpu_custom_call.1} parent=1 // pred_check_branch
      %26 = sbr.rel (0) target = $region13
    $region12: #{tpu_custom_call.1} parent=1 // pred_region
      %s28 = ssub.s32 256, 256
      %29 = vsyncadd [#allocation4], %s28
      %s31 = sshll.u32 [#allocation5], 4
      %s32 = int_to_ptr.vmem [resolvable:$true] %s31
      %34 = dma.vmem_to_hbm [thread:$0]  %s32, 256, %s1, [#allocation4]
    $region13: #{tpu_custom_call.1} parent=1 // pred_fallthru
      _
    // Predicated region
    $region14: #{tpu_custom_call.1} parent=1 // pred_check
      _
    $region15: #{tpu_custom_call.1} parent=1 // pred_check_branch
      %36 = sbr.rel (0) target = $region17
    $region16: #{tpu_custom_call.1} parent=1 // pred_region
      %37 = dma.done [#allocation4], 256
    $region17: #{tpu_custom_call.1} parent=1 // pred_fallthru
      _
    %38 = vsyncpa [#allocation3], 1
    %39 = vsyncpa [#allocation4], 1

</llo_original>
